<compile_context>
chip_gen: v6e
topology: v6e:2x2x1
jax: 0.10.0
libtpu: 0.0.40
codegen_flags: <defaults>
</compile_context>

<pallas_src>
import jax
import jax.numpy as jnp
from jax import lax
from jax.experimental import pallas as pl
from jax.experimental.pallas import tpu as pltpu


# ----------------------------- Pallas kernel -----------------------------
def _inception_kernel(x_ref, w_ref, b_ref, o_ref):
    """One batch tile per grid step.

    x_ref : (TB, L + 4, Cin)  zero-halo'd channels-last input tile (f32)
    w_ref : (6*Cin, 4*Cout)   fused im2col weight (bf16 or f32)
    b_ref : (1, 4*Cout)       fused bias (f32)
    o_ref : (TB, L, 4*Cout)   fused branch outputs [conv1|conv3|conv5|pool]
    """
    TB, Lp4, Cin = x_ref.shape
    L = o_ref.shape[1]
    M = TB * L
    cdt = w_ref.dtype                      # MXU compute dtype (bf16 by default)

    xp = x_ref[...]                        # (TB, L+4, Cin), f32

    # tap j corresponds to input offset d = j - 2 (covers the k=1/3/5 'same'
    # convolutions with a single 2-element halo).
    taps = [xp[:, j:j + L, :] for j in range(5)]
    center, left, right = taps[2], taps[1], taps[3]

    # branch-4 maxpool(k=3, s=1, pad=1): MaxPool1d pads with -inf, not zero,
    # so mask the zero-halo neighbours at the sequence ends.  One iota, masks
    # hoisted and reused.
    pos = lax.broadcasted_iota(jnp.int32, center.shape, 1)     # L index
    pool = jnp.maximum(center, jnp.where(pos > 0, left, -jnp.inf))
    pool = jnp.maximum(pool, jnp.where(pos < L - 1, right, -jnp.inf))

    # im2col: six features side-by-side on the lane axis, batch folded into M.
    feat = jnp.concatenate(
        [t.reshape(M, Cin) for t in taps] + [pool.reshape(M, Cin)], axis=-1)
    feat = feat.astype(cdt)                                    # cast at the MXU edge

    # Single fused matmul for all four branches; f32 accumulation.
    y = jnp.dot(feat, w_ref[...], preferred_element_type=jnp.float32)
    y = jnp.maximum(y + b_ref[...], 0.0)                       # fused bias + ReLU
    o_ref[...] = y.reshape(TB, L, -1).astype(o_ref.dtype)


# ------------------------------- wrappers --------------------------------
def _pick_tb(B, L, target_rows=2048):
    """Batch-fold factor TB: largest divisor of B with TB*L rows per step
    (<= target_rows keeps the per-step VMEM working set small even on v7x's
    64 MiB), preferring >= 2 grid steps so both v7x TensorCores get work.
    Batch folding needs L % 8 == 0 so (TB, L, C) <-> (TB*L, C) reshapes stay
    sublane-tile aligned; otherwise fall back to TB = 1."""
    if L % 8 != 0:
        return 1
    divs = [d for d in range(1, B + 1) if B % d == 0 and d * L <= target_rows]
    multi = [d for d in divs if B // d >= 2]
    return max(multi or divs or [1])


def inception_module_old_nlc(x_nlc, w_fused, b_fused, *, tb=None):
    """Channels-last core: (B, L, Cin) -> (B, L, 4*Cout).
    Channels-last callers should use this directly (no transposes at all)."""
    B, L, Cin = x_nlc.shape
    C4 = w_fused.shape[-1]
    tb = tb or _pick_tb(B, L)
    assert B % tb == 0

    # 2-element zero halo for the k=5 'same' conv; k=3/k=1/pool reuse inner
    # taps of the same buffer.  This pads the (small) input once; XLA fuses it
    # with the surrounding layout glue.
    x_halo = jnp.pad(x_nlc, ((0, 0), (2, 2), (0, 0)))          # (B, L+4, Cin)

    return pl.pallas_call(
        _inception_kernel,
        out_shape=jax.ShapeDtypeStruct((B, L, C4), jnp.float32),
        grid=(B // tb,),
        in_specs=[
            pl.BlockSpec((tb, L + 4, Cin), lambda g: (g, 0, 0)),
            pl.BlockSpec(w_fused.shape, lambda g: (0, 0)),     # resident weight
            pl.BlockSpec(b_fused.shape, lambda g: (0, 0)),     # resident bias
        ],
        out_specs=pl.BlockSpec((tb, L, C4), lambda g: (g, 0, 0)),
        compiler_params=pltpu.CompilerParams(
            dimension_semantics=("parallel",),   # shard batch tiles across TCs
            # per-step working set is a few MiB at these channel counts; keep
            # the scoped budget comfortably under v7x's 64 MiB physical VMEM.
            vmem_limit_bytes=48 * 1024 * 1024,
        ),
    )(x_halo, w_fused, b_fused)


def inception_module_old(x_ncl, w_fused, b_fused, *, tb=None):
    """PyTorch-layout wrapper: x (B, Cin, L) -> (B, 4*Cout, L).
    The two transposes are NCL<->NLC glue only; in a channels-last pipeline
    call inception_module_old_nlc and skip both HBM round trips."""
    x_nlc = jnp.transpose(x_ncl, (0, 2, 1))
    y = inception_module_old_nlc(x_nlc, w_fused, b_fused, tb=tb)
    return jnp.transpose(y, (0, 2, 1))


# ----------------------- fused-parameter assembly ------------------------
def make_fused_params(pt_weights, compute_dtype=jnp.bfloat16):
    """Pack the four PyTorch conv branches into one im2col weight + bias.

    Row blocks (6 x Cin): features [x(i-2), x(i-1), x(i), x(i+1), x(i+2), pool(i)].
    Col blocks (4 x Cout): branches [conv1, conv3, conv5, pool+conv1]
    (same order as torch.cat in the reference module).  Unused taps are zero.
    """
    (w1, b1), (w3, b3), (w5, b5), (w4, b4) = pt_weights      # (Cout, Cin, K)
    Cout, Cin, _ = w5.shape
    W = jnp.zeros((6 * Cin, 4 * Cout), jnp.float32)

    def put(W, feat_j, branch, w_oc):                        # w_oc: (Cout, Cin)
        return W.at[feat_j * Cin:(feat_j + 1) * Cin,
                    branch * Cout:(branch + 1) * Cout].set(w_oc.T)

    W = put(W, 2, 0, w1[:, :, 0])                            # k=1: centre tap
    for k in range(3):                                       # k=3: offsets -1..+1
        W = put(W, k + 1, 1, w3[:, :, k])
    for k in range(5):                                       # k=5: offsets -2..+2
        W = put(W, k, 2, w5[:, :, k])
    W = put(W, 5, 3, w4[:, :, 0])                            # pool branch (k=1)

    b = jnp.concatenate([b1, b3, b5, b4])[None, :].astype(jnp.float32)
    return W.astype(compute_dtype), b


# --------------------------- pure-JAX reference ---------------------------
def _conv1d_same(x_ncl, w_oik, b):
    out = lax.conv_general_dilated(
        x_ncl, w_oik, window_strides=(1,), padding="SAME",
        dimension_numbers=("NCH", "OIH", "NCH"))
    return out + b[None, :, None]


def inception_reference(x_ncl, pt_weights):
    (w1, b1), (w3, b3), (w5, b5), (w4, b4) = pt_weights
    y1 = jax.nn.relu(_conv1d_same(x_ncl, w1, b1))
    y2 = jax.nn.relu(_conv1d_same(x_ncl, w3, b3))
    y3 = jax.nn.relu(_conv1d_same(x_ncl, w5, b5))
    pool = lax.reduce_window(
        x_ncl, -jnp.inf, lax.max,
        window_dimensions=(1, 1, 3), window_strides=(1, 1, 1),
        padding=((0, 0), (0, 0), (1, 1)))
    y4 = jax.nn.relu(_conv1d_same(pool, w4, b4))
    return jnp.concatenate([y1, y2, y3, y4], axis=1)


def make_params(key, in_channels, out_channels):
    """Deterministic synthetic parameters, PyTorch Conv1d layout (Cout,Cin,K)."""
    ks = jax.random.split(key, 8)
    def w(k, K, scale=0.2):
        return scale * jax.random.normal(k, (out_channels, in_channels, K),
                                         jnp.float32)
    def b(k, scale=0.1):
        return scale * jax.random.normal(k, (out_channels,), jnp.float32)
    return ((w(ks[0], 1), b(ks[1])), (w(ks[2], 3), b(ks[3])),
            (w(ks[4], 5), b(ks[5])), (w(ks[6], 1), b(ks[7])))


if __name__ == "__main__":
    key = jax.random.PRNGKey(0)
    k_x, k_p = jax.random.split(key)

    # 4*Cout = 128 -> lane-dense output blocks; B=8, TB=4 -> 2 parallel steps.
    B, Cin, Cout, L = 8, 8, 32, 16
    x = jax.random.normal(k_x, (B, Cin, L), jnp.float32)
    pt_weights = make_params(k_p, Cin, Cout)
    ref = inception_reference(x, pt_weights)

    # float32 weights: tight check of the fused im2col construction.
    w32, b32 = make_fused_params(pt_weights, jnp.float32)
    out32 = jax.block_until_ready(jax.jit(inception_module_old)(x, w32, b32))
    assert out32.shape == (B, 4 * Cout, L), out32.shape
    err32 = float(jnp.max(jnp.abs(out32 - ref)))
    assert jnp.allclose(out32, ref, atol=1e-4, rtol=1e-4), err32

    # bfloat16 MXU path (performance default, f32 accumulation): loose check.
    wbf, bbf = make_fused_params(pt_weights, jnp.bfloat16)
    outbf = jax.block_until_ready(jax.jit(inception_module_old)(x, wbf, bbf))
    errbf = float(jnp.max(jnp.abs(outbf - ref)))
    assert jnp.allclose(outbf, ref, atol=5e-2, rtol=5e-2), errbf

    print("KERNEL_OK")
</pallas_src>

<mosaic_0001>
module attributes {stable_mosaic.version = 11 : i64} {
  func.func @_inception_kernel(%arg0: i32, %arg1: memref<4x20x8xf32, #tpu.memory_space<vmem>>, %arg2: memref<48x128xf32, #tpu.memory_space<vmem>>, %arg3: memref<1x128xf32, #tpu.memory_space<vmem>>, %arg4: memref<4x16x128xf32, #tpu.memory_space<vmem>>) attributes {dimension_semantics = [#tpu.dimension_semantics<parallel>], iteration_bounds = array<i64: 2>, scalar_prefetch = 0 : i64, scratch_operands = 0 : i64, tpu.core_type = #tpu.core_type<tc>, window_params = [{transform_indices = @transform_0, window_bounds = array<i64: 4, 20, 8>}, {pipeline_mode = #tpu.pipeline_mode<synchronous>, transform_indices = @transform_1, window_bounds = array<i64: 48, 128>}, {pipeline_mode = #tpu.pipeline_mode<synchronous>, transform_indices = @transform_2, window_bounds = array<i64: 1, 128>}, {transform_indices = @transform_3, window_bounds = array<i64: 4, 16, 128>}]} {
    %c0 = arith.constant 0 : index
    %c0_0 = arith.constant 0 : index
    %c0_1 = arith.constant 0 : index
    %0 = vector.load %arg1[%c0, %c0_0, %c0_1] : memref<4x20x8xf32, #tpu.memory_space<vmem>>, vector<4x20x8xf32>
    %1 = vector.extract_strided_slice %0 {offsets = [0, 0, 0], sizes = [4, 16, 8], strides = [1, 1, 1]} : vector<4x20x8xf32> to vector<4x16x8xf32>
    %2 = vector.extract_strided_slice %0 {offsets = [0, 1, 0], sizes = [4, 16, 8], strides = [1, 1, 1]} : vector<4x20x8xf32> to vector<4x16x8xf32>
    %3 = vector.extract_strided_slice %0 {offsets = [0, 2, 0], sizes = [4, 16, 8], strides = [1, 1, 1]} : vector<4x20x8xf32> to vector<4x16x8xf32>
    %4 = vector.extract_strided_slice %0 {offsets = [0, 3, 0], sizes = [4, 16, 8], strides = [1, 1, 1]} : vector<4x20x8xf32> to vector<4x16x8xf32>
    %5 = vector.extract_strided_slice %0 {offsets = [0, 4, 0], sizes = [4, 16, 8], strides = [1, 1, 1]} : vector<4x20x8xf32> to vector<4x16x8xf32>
    %6 = tpu.iota {dimensions = array<i32: 1>} : vector<4x16x8xi32>
    %c0_i32 = arith.constant 0 : i32
    %7 = vector.broadcast %c0_i32 : i32 to vector<4x16x8xi32>
    %8 = arith.cmpi sgt, %6, %7 : vector<4x16x8xi32>
    %cst = arith.constant 0xFF800000 : f32
    %9 = vector.broadcast %cst : f32 to vector<4x16x8xf32>
    %10 = arith.select %8, %2, %9 : vector<4x16x8xi1>, vector<4x16x8xf32>
    %11 = arith.maximumf %3, %10 : vector<4x16x8xf32>
    %c15_i32 = arith.constant 15 : i32
    %12 = vector.broadcast %c15_i32 : i32 to vector<4x16x8xi32>
    %13 = arith.cmpi slt, %6, %12 : vector<4x16x8xi32>
    %cst_2 = arith.constant 0xFF800000 : f32
    %14 = vector.broadcast %cst_2 : f32 to vector<4x16x8xf32>
    %15 = arith.select %13, %4, %14 : vector<4x16x8xi1>, vector<4x16x8xf32>
    %16 = arith.maximumf %11, %15 : vector<4x16x8xf32>
    %17 = vector.shape_cast %1 : vector<4x16x8xf32> to vector<64x8xf32>
    %18 = vector.shape_cast %2 : vector<4x16x8xf32> to vector<64x8xf32>
    %19 = vector.shape_cast %3 : vector<4x16x8xf32> to vector<64x8xf32>
    %20 = vector.shape_cast %4 : vector<4x16x8xf32> to vector<64x8xf32>
    %21 = vector.shape_cast %5 : vector<4x16x8xf32> to vector<64x8xf32>
    %22 = vector.shape_cast %16 : vector<4x16x8xf32> to vector<64x8xf32>
    %23 = tpu.concatenate %17, %18, %19, %20, %21, %22 in 1 : vector<64x8xf32>, vector<64x8xf32>, vector<64x8xf32>, vector<64x8xf32>, vector<64x8xf32>, vector<64x8xf32> -> vector<64x48xf32>
    %c0_3 = arith.constant 0 : index
    %c0_4 = arith.constant 0 : index
    %24 = vector.load %arg2[%c0_3, %c0_4] : memref<48x128xf32, #tpu.memory_space<vmem>>, vector<48x128xf32>
    %cst_5 = arith.constant dense<0.000000e+00> : vector<64x128xf32>
    %25 = tpu.matmul %23, %24, %cst_5 {dimension_numbers = #tpu.dot_dimension_numbers<[1], [0], [0], [1], [0, 0, 1, 1], [], []>} : vector<64x48xf32>, vector<48x128xf32>, vector<64x128xf32> -> vector<64x128xf32>
    %c0_6 = arith.constant 0 : index
    %c0_7 = arith.constant 0 : index
    %26 = vector.load %arg3[%c0_6, %c0_7] : memref<1x128xf32, #tpu.memory_space<vmem>>, vector<1x128xf32>
    %27 = vector.broadcast %26 : vector<1x128xf32> to vector<64x128xf32>
    %28 = arith.addf %25, %27 : vector<64x128xf32>
    %cst_8 = arith.constant 0.000000e+00 : f32
    %29 = vector.broadcast %cst_8 : f32 to vector<64x128xf32>
    %30 = arith.maximumf %28, %29 : vector<64x128xf32>
    %31 = vector.shape_cast %30 : vector<64x128xf32> to vector<4x16x128xf32>
    %c0_9 = arith.constant 0 : index
    %c0_10 = arith.constant 0 : index
    %c0_11 = arith.constant 0 : index
    %32 = vector.load %arg4[%c0_9, %c0_10, %c0_11] : memref<4x16x128xf32, #tpu.memory_space<vmem>>, vector<4x16x128xf32>
    tpu.vector_store %arg4[%c0_9, %c0_10, %c0_11], %31 {strides = array<i32>} : memref<4x16x128xf32, #tpu.memory_space<vmem>>, vector<4x16x128xf32>,
    return
  }
  func.func @transform_0(%arg0: i32) -> (i32, i32, i32) {
    %c0_i32 = arith.constant 0 : i32
    %c0_i32_0 = arith.constant 0 : i32
    %c0_i32_1 = arith.constant 0 : i32
    return %arg0, %c0_i32, %c0_i32_0 : i32, i32, i32
  }
  func.func @transform_1(%arg0: i32) -> (i32, i32) {
    %c0_i32 = arith.constant 0 : i32
    %c0_i32_0 = arith.constant 0 : i32
    %c0_i32_1 = arith.constant 0 : i32
    return %c0_i32, %c0_i32_0 : i32, i32
  }
  func.func @transform_2(%arg0: i32) -> (i32, i32) {
    %c0_i32 = arith.constant 0 : i32
    %c0_i32_0 = arith.constant 0 : i32
    %c0_i32_1 = arith.constant 0 : i32
    return %c0_i32, %c0_i32_0 : i32, i32
  }
  func.func @transform_3(%arg0: i32) -> (i32, i32, i32) {
    %c0_i32 = arith.constant 0 : i32
    %c0_i32_0 = arith.constant 0 : i32
    %c0_i32_1 = arith.constant 0 : i32
    return %arg0, %c0_i32, %c0_i32_0 : i32, i32, i32
  }
}

</mosaic_0001>

<llo_original>
// kernel: inception_module_old.1
$region0: #{inception_module_old.1}
  #allocation0 [shape = 'u32[]', space=smem, size = 0x4, offset = 0x4, fixed_abs, tag = 'smem constant byte address 0x4 - core index']
  #allocation1 [shape = 'u32[144,128]{1,0:T(1,128)}', space=vmem, size = 0x12000, scoped, tag = 'internal scratch']
  %s0 = inlined_call_operand.vmem [shape: f32[8,20,8], index: 0, kind: input, shape index: {}]
  %s1 = inlined_call_operand.vmem [shape: f32[48,128], index: 1, kind: input, shape index: {}]
  %s2 = inlined_call_operand.vmem [shape: f32[1,128], index: 2, kind: input, shape index: {}]
  %s3 = inlined_call_operand.hbm [shape: f32[8,16,128], index: 3, kind: output, shape index: {}]
  %s4 = sld [smem:[#allocation0]]
  $region45: #{inception_module_old.1} parent=0
    _
  %s6 = ssub.s32 1, %s4
  %s7 = scalar_select 0, %s6, %s4
  $region1: #{inception_module_old.1} parent=0
    #allocation2 [shape = 'u8[65536]{0}', space=vmem, size = 0x10000, scoped, tag = 'output window, operand 0']
    #allocation3 [shape = 's32[2]{0}', space=sflag, size = 0x8, scoped, tag = 'scoped memory for inception_module_old.1']
    %8 = vsyncpa [#allocation3], 0
    %s9 = scalar_lea.sflag [#allocation3], 1
    %10 = vsyncpa %s9, 0
    loop: start=0, step=1, limit=4
    $region2: #{inception_module_old.1} parent=1 // loop_pre_header
      _
    $region3: #{inception_module_old.1} parent=1 // loop_header
      %s12 = sphi 0, %s16
      %p13 = scmp.ge.s32.totalorder %s12, 4
      %s22 = sphi 0, %s24
      %s25 = sphi 0, %s22
      %s26 = sphi 0, %s25
      %s42 = sphi 0, %s26
      %s46 = sphi 0, %s46
      %s48 = sphi 0, %s46
      %s49 = sphi 0, %s48
      %s63 = sphi 0, %s49
      %s67 = sphi 0, %s67
      %s69 = sphi 0, %s67
      %s70 = sphi 0, %s69
      %s84 = sphi 0, %s70
      %s90 = sphi 0, %s92
      %s93 = sphi 0, %s90
      %s94 = sphi 0, %s93
      %s110 = sphi 0, %s94
    $region4: #{inception_module_old.1} parent=1 // loop_header_branch
      %15 = sbr.rel (%p13) target = $region8
    $region5: #{inception_module_old.1} parent=1 // loop_body
      %s17 = ssub.s32 %s12, 1
      %s18 = ssub.s32 %s12, 2
      %s19 = sadd.s32 %s12, 1
      %s20 = ssub.s32 %s12, %s19
      %p21 = scmp.eq.s32.totalorder %s20, 0
      %s23 = sadd.s32 %s22, 1
      %s24 = scalar_select %p21, %s22, %s23
      %p27 = pneg %p21
      %p28 = scmp.eq.s32.totalorder %s12, 1
      %p29 = por %p27, %p28
      %p30 = scmp.ne.s32.totalorder %s22, %s25
      %p31 = scmp.eq.s32.totalorder %s12, 0
      %p32 = por %p30, %p31
      %p33 = scmp.ne.s32.totalorder %s22, %s25
      %p34 = scmp.eq.s32.totalorder %s17, 1
      %p35 = por %p33, %p34
      %p36 = scmp.ne.s32.totalorder %s25, %s26
      %p37 = scmp.eq.s32.totalorder %s17, 0
      %p38 = por %p36, %p37
      %p39 = scmp.ne.s32.totalorder %s25, %s26
      %p40 = scmp.eq.s32.totalorder %s18, 1
      %p41 = por %p39, %p40
      %p43 = scmp.ne.s32.totalorder %s26, %s42
      %p44 = scmp.eq.s32.totalorder %s18, 0
      %p45 = por %p43, %p44
      %s47 = sadd.s32 %s46, 1
      %p50 = scmp.eq.s32.totalorder %s12, 1
      %p51 = scmp.ne.s32.totalorder %s46, %s48
      %p52 = scmp.eq.s32.totalorder %s12, 0
      %p53 = por %p51, %p52
      %p54 = scmp.ne.s32.totalorder %s46, %s48
      %p55 = scmp.eq.s32.totalorder %s17, 1
      %p56 = por %p54, %p55
      %p57 = scmp.ne.s32.totalorder %s48, %s49
      %p58 = scmp.eq.s32.totalorder %s17, 0
      %p59 = por %p57, %p58
      %p60 = scmp.ne.s32.totalorder %s48, %s49
      %p61 = scmp.eq.s32.totalorder %s18, 1
      %p62 = por %p60, %p61
      %p64 = scmp.ne.s32.totalorder %s49, %s63
      %p65 = scmp.eq.s32.totalorder %s18, 0
      %p66 = por %p64, %p65
      %s68 = sadd.s32 %s67, 1
      %p71 = scmp.eq.s32.totalorder %s12, 1
      %p72 = scmp.ne.s32.totalorder %s67, %s69
      %p73 = scmp.eq.s32.totalorder %s12, 0
      %p74 = por %p72, %p73
      %p75 = scmp.ne.s32.totalorder %s67, %s69
      %p76 = scmp.eq.s32.totalorder %s17, 1
      %p77 = por %p75, %p76
      %p78 = scmp.ne.s32.totalorder %s69, %s70
      %p79 = scmp.eq.s32.totalorder %s17, 0
      %p80 = por %p78, %p79
      %p81 = scmp.ne.s32.totalorder %s69, %s70
      %p82 = scmp.eq.s32.totalorder %s18, 1
      %p83 = por %p81, %p82
      %p85 = scmp.ne.s32.totalorder %s70, %s84
      %p86 = scmp.eq.s32.totalorder %s18, 0
      %p87 = por %p85, %p86
      %s88 = ssub.s32 %s12, %s19
      %p89 = scmp.eq.s32.totalorder %s88, 0
      %s91 = sadd.s32 %s90, 1
      %s92 = scalar_select %p89, %s90, %s91
      %p95 = pneg %p89
      %p96 = scmp.eq.s32.totalorder %s12, 1
      %p97 = por %p95, %p96
      %p98 = scmp.ne.s32.totalorder %s90, %s93
      %p99 = scmp.eq.s32.totalorder %s12, 0
      %p100 = por %p98, %p99
      %p101 = scmp.ne.s32.totalorder %s90, %s93
      %p102 = scmp.eq.s32.totalorder %s17, 1
      %p103 = por %p101, %p102
      %p104 = scmp.ne.s32.totalorder %s93, %s94
      %p105 = scmp.eq.s32.totalorder %s17, 0
      %p106 = por %p104, %p105
      %p107 = scmp.ne.s32.totalorder %s93, %s94
      %p108 = scmp.eq.s32.totalorder %s18, 1
      %p109 = por %p107, %p108
      %p111 = scmp.ne.s32.totalorder %s94, %s110
      %p112 = scmp.eq.s32.totalorder %s18, 0
      %p113 = por %p111, %p112
      %p114 = scmp.le.s32.totalorder 1, %s12
      %p115 = scmp.lt.s32.totalorder %s12, 3
      %p116 = pnand %p114, %p115
      %p117 = pneg %p116
      // Predicated region
      $region9: #{inception_module_old.1} parent=5 // pred_check
        _
      $region10: #{inception_module_old.1} parent=5 // pred_check_branch
        %119 = sbr.rel (%p116) target = $region12
      $region11: #{inception_module_old.1} parent=5 // pred_region
        %s120 = ssub.s32 %s12, 1
        // Predicated region
        $region13: #{inception_module_old.1} parent=11 // pred_check
          %p121 = pneg %p59
        $region14: #{inception_module_old.1} parent=11 // pred_check_branch
          %123 = sbr.rel (%p121) target = $region16
        $region15: #{inception_module_old.1} parent=11 // pred_region
          _
        $region16: #{inception_module_old.1} parent=11 // pred_fallthru
          _
        // Predicated region
        $region17: #{inception_module_old.1} parent=11 // pred_check
          %p124 = pneg %p80
        $region18: #{inception_module_old.1} parent=11 // pred_check_branch
          %126 = sbr.rel (%p124) target = $region20
        $region19: #{inception_module_old.1} parent=11 // pred_region
          _
        $region20: #{inception_module_old.1} parent=11 // pred_fallthru
          _
      $region12: #{inception_module_old.1} parent=5 // pred_fallthru
        _
      %p127 = scmp.lt.s32.totalorder %s12, 2
      // Predicated region
      $region21: #{inception_module_old.1} parent=5 // pred_check
        %p128 = pneg %p127
      $region22: #{inception_module_old.1} parent=5 // pred_check_branch
        %130 = sbr.rel (%p128) target = $region24
      $region23: #{inception_module_old.1} parent=5 // pred_region
        // Predicated region
        $region25: #{inception_module_old.1} parent=23 // pred_check
          %p131 = pneg %p32
        $region26: #{inception_module_old.1} parent=23 // pred_check_branch
          %133 = sbr.rel (%p131) target = $region28
        $region27: #{inception_module_old.1} parent=23 // pred_region
          %s134 = smul.u32 4, %s12
          %p135 = scmp.lt.s32.totalorder %s134, 7
          %s136 = scalar_select %p135, %s134, 7
          %s137 = smul.addr %s136, 3
          %s138 = smul.addr %s137, 8
          %s139 = scalar_lea.vmem %s0, %s138
          %s140 = smul.u32 4, %s12
        $region28: #{inception_module_old.1} parent=23 // pred_fallthru
          _
      $region24: #{inception_module_old.1} parent=5 // pred_fallthru
        _
      %p141 = scmp.le.s32.totalorder 1, %s12
      %p142 = scmp.lt.s32.totalorder %s12, 3
      %p143 = pnand %p141, %p142
      %p144 = pneg %p143
      // Predicated region
      $region29: #{inception_module_old.1} parent=5 // pred_check
        _
      $region30: #{inception_module_old.1} parent=5 // pred_check_branch
        %146 = sbr.rel (%p143) target = $region32
      $region31: #{inception_module_old.1} parent=5 // pred_region
        %s147 = ssub.s32 %s12, 1
        %s148 = smul.u32 4, %s17
        %p149 = scmp.lt.s32.totalorder %s148, 7
        %s150 = scalar_select %p149, %s148, 7
        %s151 = smul.addr %s150, 3
        %s152 = smul.addr %s151, 8
        %s153 = scalar_lea.vmem %s0, %s152
        %p154 = pneg %p38
        %p155 = pneg %p35
        %p156 = pneg %p59
        %p157 = pneg %p56
        %p158 = pneg %p80
        %p159 = pneg %p77
        %p160 = pneg %p106
        %p161 = pneg %p103
        %s162 = sand.u32 %s93, 1
        %s163 = scalar_lea.sflag [#allocation3], %s162
        %s164 = sand.u32 %s93, 1
        %s165 = smul.addr %s164, 64
        %s166 = scalar_lea.vmem [#allocation2], %s165
        %s167 = smul.u32 4, %s17
        %p168 = scmp.lt.s32.totalorder %s167, 7
        %s169 = scalar_select %p168, %s167, 7
        %s170 = smul.addr %s169, 3
        %s171 = smul.addr %s170, 8
        %s172 = scalar_lea.vmem %s0, %s171
        %s173 = smul.u32 4, %s17
        %s174 = smul.u32 4, %s17
        %v175 = vld [vmem:[%s172] sm:$0xff]
        %v176 = vld [vmem:[%s172 + $0x8] sm:$0xff]
        %v177 = vld [vmem:[%s172 + $0x10] sm:$0xf]
        %v178 = vld [vmem:[%s172 + $0x18] sm:$0xff]
        %v179 = vld [vmem:[%s172 + $0x20] sm:$0xff]
        %v180 = vld [vmem:[%s172 + $0x28] sm:$0xf]
        %v181 = vld [vmem:[%s172 + $0x30] sm:$0xff]
        %v182 = vld [vmem:[%s172 + $0x38] sm:$0xff]
        %v183 = vld [vmem:[%s172 + $0x40] sm:$0xf]
        %v184 = vld [vmem:[%s172 + $0x48] sm:$0xff]
        %v185 = vld [vmem:[%s172 + $0x50] sm:$0xff]
        %v186 = vld [vmem:[%s172 + $0x58] sm:$0xf]
        %v187 = vlaneseq
        %v188 = vshrl.u32 %v187, 7
        %v189 = vadd.s32 %v188, 8
        %vm190 = vcmp.gt.s32.totalorder %v188, 0
        %vm191 = vcmp.gt.s32.totalorder %v189, 0
        %vm204 = vcmask 1046528
        %v205 = vrot.slane %v175, 1
        %v206 = vrot.slane %v176, 1
        %v207 = vsel %vm204, %v205, %v206
        %v208 = vrot.slane %v177, 1
        %v209 = vsel %vm204, %v206, %v208
        %v210 = vrot.slane %v178, 1
        %v211 = vrot.slane %v179, 1
        %v212 = vsel %vm204, %v210, %v211
        %v213 = vrot.slane %v180, 1
        %v214 = vsel %vm204, %v211, %v213
        %v215 = vrot.slane %v181, 1
        %v216 = vrot.slane %v182, 1
        %v217 = vsel %vm204, %v215, %v216
        %v218 = vrot.slane %v183, 1
        %v219 = vsel %vm204, %v216, %v218
        %v220 = vrot.slane %v184, 1
        %v221 = vrot.slane %v185, 1
        %v222 = vsel %vm204, %v220, %v221
        %v223 = vrot.slane %v186, 1
        %v224 = vsel %vm204, %v221, %v223
        %v233 = vsel %vm190, %v207, -inf
        %v234 = vsel %vm191, %v209, -inf
        %v235 = vsel %vm190, %v212, -inf
        %v236 = vsel %vm191, %v214, -inf
        %v237 = vsel %vm190, %v217, -inf
        %v238 = vsel %vm191, %v219, -inf
        %v239 = vsel %vm190, %v222, -inf
        %v240 = vsel %vm191, %v224, -inf
        %vm249 = vcmask 1041408
        %v250 = vrot.slane %v233, 6
        %v251 = vrot.slane %v234, 6
        %v252 = vsel %vm249, %v250, %v251
        %v253 = vrot.slane %v235, 6
        %v254 = vrot.slane %v236, 6
        %v255 = vsel %vm249, %v253, %v254
        %v256 = vrot.slane %v237, 6
        %v257 = vrot.slane %v238, 6
        %v258 = vsel %vm249, %v256, %v257
        %v259 = vrot.slane %v239, 6
        %v260 = vrot.slane %v240, 6
        %v261 = vsel %vm249, %v259, %v260
        %v274 = vmax.f32 %v175, %v250
        %v275 = vmax.f32 %v176, %v252
        %v276 = vmax.f32 %v177, %v251
        %v277 = vmax.f32 %v178, %v253
        %v278 = vmax.f32 %v179, %v255
        %v279 = vmax.f32 %v180, %v254
        %v280 = vmax.f32 %v181, %v256
        %v281 = vmax.f32 %v182, %v258
        %v282 = vmax.f32 %v183, %v257
        %v283 = vmax.f32 %v184, %v259
        %v284 = vmax.f32 %v185, %v261
        %v285 = vmax.f32 %v186, %v260
        %vm286 = vcmp.lt.s32.totalorder %v188, 15
        %vm287 = vcmp.lt.s32.totalorder %v189, 15
        %vm288 = vcmask 1044480
        %v289 = vrot.slane %v175, 3
        %v290 = vrot.slane %v176, 3
        %v291 = vsel %vm288, %v289, %v290
        %v292 = vrot.slane %v177, 3
        %v293 = vsel %vm288, %v290, %v292
        %v294 = vrot.slane %v178, 3
        %v295 = vrot.slane %v179, 3
        %v296 = vsel %vm288, %v294, %v295
        %v297 = vrot.slane %v180, 3
        %v298 = vsel %vm288, %v295, %v297
        %v299 = vrot.slane %v181, 3
        %v300 = vrot.slane %v182, 3
        %v301 = vsel %vm288, %v299, %v300
        %v302 = vrot.slane %v183, 3
        %v303 = vsel %vm288, %v300, %v302
        %v304 = vrot.slane %v184, 3
        %v305 = vrot.slane %v185, 3
        %v306 = vsel %vm288, %v304, %v305
        %v307 = vrot.slane %v186, 3
        %v308 = vsel %vm288, %v305, %v307
        %v317 = vsel %vm286, %v291, -inf
        %v318 = vsel %vm287, %v293, -inf
        %v319 = vsel %vm286, %v296, -inf
        %v320 = vsel %vm287, %v298, -inf
        %v321 = vsel %vm286, %v301, -inf
        %v322 = vsel %vm287, %v303, -inf
        %v323 = vsel %vm286, %v306, -inf
        %v324 = vsel %vm287, %v308, -inf
        %v333 = vrot.slane %v317, 6
        %v334 = vrot.slane %v318, 6
        %v335 = vsel %vm249, %v333, %v334
        %v336 = vrot.slane %v319, 6
        %v337 = vrot.slane %v320, 6
        %v338 = vsel %vm249, %v336, %v337
        %v339 = vrot.slane %v321, 6
        %v340 = vrot.slane %v322, 6
        %v341 = vsel %vm249, %v339, %v340
        %v342 = vrot.slane %v323, 6
        %v343 = vrot.slane %v324, 6
        %v344 = vsel %vm249, %v342, %v343
        %v357 = vmax.f32 %v274, %v333
        %v358 = vmax.f32 %v275, %v335
        %v359 = vmax.f32 %v276, %v334
        %v360 = vmax.f32 %v277, %v336
        %v361 = vmax.f32 %v278, %v338
        %v362 = vmax.f32 %v279, %v337
        %v363 = vmax.f32 %v280, %v339
        %v364 = vmax.f32 %v281, %v341
        %v365 = vmax.f32 %v282, %v340
        %v366 = vmax.f32 %v283, %v342
        %v367 = vmax.f32 %v284, %v344
        %v368 = vmax.f32 %v285, %v343
        %vm369 = vcmask 1045504
        %v370 = vrot.slane %v175, 2
        %v371 = vrot.slane %v176, 2
        %v372 = vsel %vm369, %v370, %v371
        %v373 = vrot.slane %v177, 2
        %v374 = vsel %vm369, %v371, %v373
        %v375 = vrot.slane %v178, 2
        %v376 = vrot.slane %v179, 2
        %v377 = vsel %vm369, %v375, %v376
        %v378 = vrot.slane %v180, 2
        %v379 = vsel %vm369, %v376, %v378
        %v380 = vrot.slane %v181, 2
        %v381 = vrot.slane %v182, 2
        %v382 = vsel %vm369, %v380, %v381
        %v383 = vrot.slane %v183, 2
        %v384 = vsel %vm369, %v381, %v383
        %v385 = vrot.slane %v184, 2
        %v386 = vrot.slane %v185, 2
        %v387 = vsel %vm369, %v385, %v386
        %v388 = vrot.slane %v186, 2
        %v389 = vsel %vm369, %v386, %v388
        %vm390 = vcmask 1043456
        %v391 = vrot.slane %v175, 4
        %v392 = vrot.slane %v176, 4
        %v393 = vsel %vm390, %v391, %v392
        %v394 = vrot.slane %v177, 4
        %v395 = vsel %vm390, %v392, %v394
        %v396 = vrot.slane %v178, 4
        %v397 = vrot.slane %v179, 4
        %v398 = vsel %vm390, %v396, %v397
        %v399 = vrot.slane %v180, 4
        %v400 = vsel %vm390, %v397, %v399
        %v401 = vrot.slane %v181, 4
        %v402 = vrot.slane %v182, 4
        %v403 = vsel %vm390, %v401, %v402
        %v404 = vrot.slane %v183, 4
        %v405 = vsel %vm390, %v402, %v404
        %v406 = vrot.slane %v184, 4
        %v407 = vrot.slane %v185, 4
        %v408 = vsel %vm390, %v406, %v407
        %v409 = vrot.slane %v186, 4
        %v410 = vsel %vm390, %v407, %v409
        %v423 = vrot.slane %v357, 2
        %v424 = vrot.slane %v358, 2
        %v425 = vsel %vm369, %v423, %v424
        %v426 = vrot.slane %v359, 2
        %v427 = vsel %vm369, %v424, %v426
        %v428 = vrot.slane %v360, 2
        %v429 = vrot.slane %v361, 2
        %v430 = vsel %vm369, %v428, %v429
        %v431 = vrot.slane %v362, 2
        %v432 = vsel %vm369, %v429, %v431
        %v433 = vrot.slane %v363, 2
        %v434 = vrot.slane %v364, 2
        %v435 = vsel %vm369, %v433, %v434
        %v436 = vrot.slane %v365, 2
        %v437 = vsel %vm369, %v434, %v436
        %v438 = vrot.slane %v366, 2
        %v439 = vrot.slane %v367, 2
        %v440 = vsel %vm369, %v438, %v439
        %v441 = vrot.slane %v368, 2
        %v442 = vsel %vm369, %v439, %v441
        %443 = vrot.lane.b32.xlu0 %v207, 8
        %v444 = vpop.permute.xlu0 %443
        %445 = vrot.lane.b32.xlu0 %v209, 8
        %v446 = vpop.permute.xlu0 %445
        %447 = vrot.lane.b32.xlu0 %v212, 8
        %v448 = vpop.permute.xlu0 %447
        %449 = vrot.lane.b32.xlu0 %v214, 8
        %v450 = vpop.permute.xlu0 %449
        %451 = vrot.lane.b32.xlu0 %v217, 8
        %v452 = vpop.permute.xlu0 %451
        %453 = vrot.lane.b32.xlu0 %v219, 8
        %v454 = vpop.permute.xlu0 %453
        %455 = vrot.lane.b32.xlu0 %v222, 8
        %v456 = vpop.permute.xlu0 %455
        %457 = vrot.lane.b32.xlu0 %v224, 8
        %v458 = vpop.permute.xlu0 %457
        %467 = vrot.lane.b32.xlu0 %v372, 16
        %v468 = vpop.permute.xlu0 %467
        %469 = vrot.lane.b32.xlu0 %v374, 16
        %v470 = vpop.permute.xlu0 %469
        %471 = vrot.lane.b32.xlu0 %v377, 16
        %v472 = vpop.permute.xlu0 %471
        %473 = vrot.lane.b32.xlu0 %v379, 16
        %v474 = vpop.permute.xlu0 %473
        %475 = vrot.lane.b32.xlu0 %v382, 16
        %v476 = vpop.permute.xlu0 %475
        %477 = vrot.lane.b32.xlu0 %v384, 16
        %v478 = vpop.permute.xlu0 %477
        %479 = vrot.lane.b32.xlu0 %v387, 16
        %v480 = vpop.permute.xlu0 %479
        %481 = vrot.lane.b32.xlu0 %v389, 16
        %v482 = vpop.permute.xlu0 %481
        %491 = vrot.lane.b32.xlu0 %v291, 24
        %v492 = vpop.permute.xlu0 %491
        %493 = vrot.lane.b32.xlu0 %v293, 24
        %v494 = vpop.permute.xlu0 %493
        %495 = vrot.lane.b32.xlu0 %v296, 24
        %v496 = vpop.permute.xlu0 %495
        %497 = vrot.lane.b32.xlu0 %v298, 24
        %v498 = vpop.permute.xlu0 %497
        %499 = vrot.lane.b32.xlu0 %v301, 24
        %v500 = vpop.permute.xlu0 %499
        %501 = vrot.lane.b32.xlu0 %v303, 24
        %v502 = vpop.permute.xlu0 %501
        %503 = vrot.lane.b32.xlu0 %v306, 24
        %v504 = vpop.permute.xlu0 %503
        %505 = vrot.lane.b32.xlu0 %v308, 24
        %v506 = vpop.permute.xlu0 %505
        %515 = vrot.lane.b32.xlu0 %v393, 32
        %v516 = vpop.permute.xlu0 %515
        %517 = vrot.lane.b32.xlu0 %v395, 32
        %v518 = vpop.permute.xlu0 %517
        %519 = vrot.lane.b32.xlu0 %v398, 32
        %v520 = vpop.permute.xlu0 %519
        %521 = vrot.lane.b32.xlu0 %v400, 32
        %v522 = vpop.permute.xlu0 %521
        %523 = vrot.lane.b32.xlu0 %v403, 32
        %v524 = vpop.permute.xlu0 %523
        %525 = vrot.lane.b32.xlu0 %v405, 32
        %v526 = vpop.permute.xlu0 %525
        %527 = vrot.lane.b32.xlu0 %v408, 32
        %v528 = vpop.permute.xlu0 %527
        %529 = vrot.lane.b32.xlu0 %v410, 32
        %v530 = vpop.permute.xlu0 %529
        %539 = vrot.lane.b32.xlu0 %v425, 40
        %v540 = vpop.permute.xlu0 %539
        %541 = vrot.lane.b32.xlu0 %v427, 40
        %v542 = vpop.permute.xlu0 %541
        %543 = vrot.lane.b32.xlu0 %v430, 40
        %v544 = vpop.permute.xlu0 %543
        %545 = vrot.lane.b32.xlu0 %v432, 40
        %v546 = vpop.permute.xlu0 %545
        %547 = vrot.lane.b32.xlu0 %v435, 40
        %v548 = vpop.permute.xlu0 %547
        %549 = vrot.lane.b32.xlu0 %v437, 40
        %v550 = vpop.permute.xlu0 %549
        %551 = vrot.lane.b32.xlu0 %v440, 40
        %v552 = vpop.permute.xlu0 %551
        %553 = vrot.lane.b32.xlu0 %v442, 40
        %v554 = vpop.permute.xlu0 %553
        %vm563 = vcmask 64512
        %v564 = vsel %vm563, %v175, %v444
        %v565 = vsel %vm563, %v176, %v446
        %v566 = vsel %vm563, %v178, %v448
        %v567 = vsel %vm563, %v179, %v450
        %v568 = vsel %vm563, %v181, %v452
        %v569 = vsel %vm563, %v182, %v454
        %v570 = vsel %vm563, %v184, %v456
        %v571 = vsel %vm563, %v185, %v458
        %vm572 = vcmask 130048
        %v573 = vsel %vm572, %v564, %v468
        %v574 = vsel %vm572, %v565, %v470
        %v575 = vsel %vm572, %v566, %v472
        %v576 = vsel %vm572, %v567, %v474
        %v577 = vsel %vm572, %v568, %v476
        %v578 = vsel %vm572, %v569, %v478
        %v579 = vsel %vm572, %v570, %v480
        %v580 = vsel %vm572, %v571, %v482
        %vm581 = vcmask 195584
        %v582 = vsel %vm581, %v573, %v492
        %v583 = vsel %vm581, %v574, %v494
        %v584 = vsel %vm581, %v575, %v496
        %v585 = vsel %vm581, %v576, %v498
        %v586 = vsel %vm581, %v577, %v500
        %v587 = vsel %vm581, %v578, %v502
        %v588 = vsel %vm581, %v579, %v504
        %v589 = vsel %vm581, %v580, %v506
        %vm590 = vcmask 261120
        %v591 = vsel %vm590, %v582, %v516
        %v592 = vsel %vm590, %v583, %v518
        %v593 = vsel %vm590, %v584, %v520
        %v594 = vsel %vm590, %v585, %v522
        %v595 = vsel %vm590, %v586, %v524
        %v596 = vsel %vm590, %v587, %v526
        %v597 = vsel %vm590, %v588, %v528
        %v598 = vsel %vm590, %v589, %v530
        %vm599 = vcmask 326656
        %v600 = vsel %vm599, %v591, %v540
        %v601 = vsel %vm599, %v592, %v542
        %v602 = vsel %vm599, %v593, %v544
        %v603 = vsel %vm599, %v594, %v546
        %v604 = vsel %vm599, %v595, %v548
        %v605 = vsel %vm599, %v596, %v550
        %v606 = vsel %vm599, %v597, %v552
        %v607 = vsel %vm599, %v598, %v554
        %v608 = vld [vmem:[%s1] sm:$0xff]
        %v609 = vld [vmem:[%s1 + $0x8] sm:$0xff]
        %v610 = vld [vmem:[%s1 + $0x10] sm:$0xff]
        %v611 = vld [vmem:[%s1 + $0x18] sm:$0xff]
        %v612 = vld [vmem:[%s1 + $0x20] sm:$0xff]
        %v613 = vld [vmem:[%s1 + $0x28] sm:$0xff]
        %v614 = vld [vmem:[%s2] sm:$0x1]
        %v616 = vlaneseq
        %v617 = vshrl.u32 %v616, 7
        %v618 = vsub.s32 0, %v617
        %v619 = vrot.slane %v614, %v618
        %vm621 = vcmask 392192
        %v623 = vsel %vm621, %v600, 0
        %v626 = vsel %vm621, %v601, 0
        %v629 = vsel %vm621, %v602, 0
        %v632 = vsel %vm621, %v603, 0
        %v635 = vsel %vm621, %v604, 0
        %v638 = vsel %vm621, %v605, 0
        %v641 = vsel %vm621, %v606, 0
        %v644 = vsel %vm621, %v607, 0
        %646 = vmatprep.subr.mxu0 0.0
        %647 = vmatpush1.msra.mxu0 0.0
        %648 = vmatprep.subr.mxu0 0.0
        %649 = vmatpush1.msra.mxu0 0.0
        %650 = vmatprep.subr.mxu0 0.0
        %651 = vmatpush1.msra.mxu0 0.0
        %652 = vmatprep.subr.mxu0 0.0
        %653 = vmatpush1.msra.mxu0 0.0
        %654 = vmatprep.subr.mxu0 0.0
        %655 = vmatpush1.msra.mxu0 0.0
        %656 = vmatprep.subr.mxu0 0.0
        %657 = vmatpush1.msra.mxu0 0.0
        %658 = vmatprep.subr.mxu0 0.0
        %659 = vmatpush1.msra.mxu0 0.0
        %660 = vmatprep.subr.mxu0 0.0
        %661 = vmatpush1.msra.mxu0 0.0
        %662 = vmatprep.subr.mxu0 0.0
        %663 = vmatpush1.msra.mxu0 0.0
        %664 = vmatprep.subr.mxu0 0.0
        %665 = vmatpush1.msra.mxu0 0.0
        %666 = vmatprep.subr.mxu0 0.0
        %667 = vmatpush1.msra.mxu0 %v613
        %668 = vmatprep.subr.mxu0 0.0
        %669 = vmatpush1.msra.mxu0 %v612
        %670 = vmatprep.subr.mxu0 0.0
        %671 = vmatpush1.msra.mxu0 %v611
        %672 = vmatprep.subr.mxu0 0.0
        %673 = vmatpush1.msra.mxu0 %v610
        %674 = vmatprep.subr.mxu0 0.0
        %675 = vmatpush1.msra.mxu0 %v609
        %676 = vmatprep.subr.mxu0 0.0
        %677 = vmatpush1.msra.mxu0 %v608
        %678 = vmatprep.subr.mxu0 0.0
        %679 = vmatpush2.msra.mxu0 0.0
        %680 = vmatprep.subr.mxu0 0.0
        %681 = vmatpush2.msra.mxu0 0.0
        %682 = vmatprep.subr.mxu0 0.0
        %683 = vmatpush2.msra.mxu0 0.0
        %684 = vmatprep.subr.mxu0 0.0
        %685 = vmatpush2.msra.mxu0 0.0
        %686 = vmatprep.subr.mxu0 0.0
        %687 = vmatpush2.msra.mxu0 0.0
        %688 = vmatprep.subr.mxu0 0.0
        %689 = vmatpush2.msra.mxu0 0.0
        %690 = vmatprep.subr.mxu0 0.0
        %691 = vmatpush2.msra.mxu0 0.0
        %692 = vmatprep.subr.mxu0 0.0
        %693 = vmatpush2.msra.mxu0 0.0
        %694 = vmatprep.subr.mxu0 0.0
        %695 = vmatpush2.msra.mxu0 0.0
        %696 = vmatprep.subr.mxu0 0.0
        %697 = vmatpush2.msra.mxu0 0.0
        %698 = vmatprep.subr.mxu0 0.0
        %699 = vmatpush2.msra.mxu0 0.0
        %700 = vmatprep.subr.mxu0 0.0
        %701 = vmatpush2.msra.mxu0 0.0
        %702 = vmatprep.subr.mxu0 0.0
        %703 = vmatpush2.msra.mxu0 0.0
        %704 = vmatprep.subr.mxu0 0.0
        %705 = vmatpush2.msra.mxu0 0.0
        %706 = vmatprep.subr.mxu0 0.0
        %707 = vmatpush2.msra.mxu0 0.0
        %708 = vmatprep.subr.mxu0 0.0
        %709 = vmatpush2.msra.mxu0 0.0
        %710 = vmatprep.mubr.f32.mxu0 0.0
        %711 = vmatmul.mubr.f32.gmra.mxu0 %v623
        %v712 = vpop.f32.mrf.mxu0
        %v713 = vadd.f32 %v619, %v712
        %v714 = vpop.f32.mrf.mxu0
        %715 = vmatprep.mubr.f32.mxu0 0.0
        %716 = vmatmul.mubr.f32.gmra.mxu0 %v626
        %v717 = vpop.f32.mrf.mxu0
        %v718 = vadd.f32 %v619, %v717
        %v719 = vpop.f32.mrf.mxu0
        %720 = vmatprep.mubr.f32.mxu0 0.0
        %721 = vmatmul.mubr.f32.gmra.mxu0 %v629
        %v722 = vpop.f32.mrf.mxu0
        %v723 = vadd.f32 %v619, %v722
        %v724 = vpop.f32.mrf.mxu0
        %725 = vmatprep.mubr.f32.mxu0 0.0
        %726 = vmatmul.mubr.f32.gmra.mxu0 %v632
        %v727 = vpop.f32.mrf.mxu0
        %v728 = vadd.f32 %v619, %v727
        %v729 = vpop.f32.mrf.mxu0
        %730 = vmatprep.mubr.f32.mxu0 0.0
        %731 = vmatmul.mubr.f32.gmra.mxu0 %v635
        %v732 = vpop.f32.mrf.mxu0
        %v733 = vadd.f32 %v619, %v732
        %v734 = vpop.f32.mrf.mxu0
        %735 = vmatprep.mubr.f32.mxu0 0.0
        %736 = vmatmul.mubr.f32.gmra.mxu0 %v638
        %v737 = vpop.f32.mrf.mxu0
        %v738 = vadd.f32 %v619, %v737
        %v739 = vpop.f32.mrf.mxu0
        %740 = vmatprep.mubr.f32.mxu0 0.0
        %741 = vmatmul.mubr.f32.gmra.mxu0 %v641
        %v742 = vpop.f32.mrf.mxu0
        %v743 = vadd.f32 %v619, %v742
        %v744 = vpop.f32.mrf.mxu0
        %745 = vmatprep.mubr.f32.mxu0 0.0
        %746 = vmatmul.mubr.f32.gmra.mxu0 %v644
        %v747 = vpop.f32.mrf.mxu0
        %v748 = vadd.f32 %v619, %v747
        %v749 = vpop.f32.mrf.mxu0
        %750 = vdwg.mxu0
        %v751 = vmax.f32 %v713, 0.0
        %v752 = vmax.f32 %v718, 0.0
        %v753 = vmax.f32 %v723, 0.0
        %v754 = vmax.f32 %v728, 0.0
        %v755 = vmax.f32 %v733, 0.0
        %v756 = vmax.f32 %v738, 0.0
        %v757 = vmax.f32 %v743, 0.0
        %v758 = vmax.f32 %v748, 0.0
        %759 = vst [vmem:[%s166] sm:$0xff] %v751
        %760 = vst [vmem:[%s166 + $0x8] sm:$0xff] %v752
        %761 = vst [vmem:[%s166 + $0x10] sm:$0xff] %v753
        %762 = vst [vmem:[%s166 + $0x18] sm:$0xff] %v754
        %763 = vst [vmem:[%s166 + $0x20] sm:$0xff] %v755
        %764 = vst [vmem:[%s166 + $0x28] sm:$0xff] %v756
        %765 = vst [vmem:[%s166 + $0x30] sm:$0xff] %v757
        %766 = vst [vmem:[%s166 + $0x38] sm:$0xff] %v758
        %s767 = sand.u32 %s93, 1
        %s768 = scalar_lea.sflag [#allocation3], %s767
        %s769 = sand.u32 %s93, 1
        %s770 = smul.addr %s769, 64
        %s771 = scalar_lea.vmem [#allocation2], %s770
        // Predicated region
        $region33: #{inception_module_old.1} parent=31 // pred_check
          %p772 = pneg %p103
        $region34: #{inception_module_old.1} parent=31 // pred_check_branch
          %774 = sbr.rel (%p772) target = $region36
        $region35: #{inception_module_old.1} parent=31 // pred_region
          %s775 = smul.u32 4, %s17
          %s777 = ssub.s32 1024, 1024
          %778 = vsyncadd %s768, %s777
          %s779 = smul.addr %s775, 2
          %s780 = smul.addr %s779, 128
          %s781 = scalar_lea.hbm %s3, %s780
          %s782 = sshll.u32 %s771, 4
          %s783 = int_to_ptr.vmem [resolvable:$true] %s782
          %788 = dma.vmem_to_hbm [thread:$0]  %s783, 1024, %s781, %s768, 128, 128, 8
        $region36: #{inception_module_old.1} parent=31 // pred_fallthru
          _
      $region32: #{inception_module_old.1} parent=5 // pred_fallthru
        _
      %p789 = scmp.le.s32.totalorder 2, %s12
      // Predicated region
      $region37: #{inception_module_old.1} parent=5 // pred_check
        %p790 = pneg %p789
      $region38: #{inception_module_old.1} parent=5 // pred_check_branch
        %792 = sbr.rel (%p790) target = $region40
      $region39: #{inception_module_old.1} parent=5 // pred_region
        %s793 = ssub.s32 %s12, 2
        // Predicated region
        $region41: #{inception_module_old.1} parent=39 // pred_check
          %p794 = pneg %p109
        $region42: #{inception_module_old.1} parent=39 // pred_check_branch
          %796 = sbr.rel (%p794) target = $region44
        $region43: #{inception_module_old.1} parent=39 // pred_region
          %s797 = sand.u32 %s94, 1
          %s798 = scalar_lea.sflag [#allocation3], %s797
          %s799 = sand.u32 %s94, 1
          %s800 = smul.addr %s799, 64
          %s801 = scalar_lea.vmem [#allocation2], %s800
          %802 = dma.done %s798, 1024
        $region44: #{inception_module_old.1} parent=39 // pred_fallthru
          _
      $region40: #{inception_module_old.1} parent=5 // pred_fallthru
        _
    $region6: #{inception_module_old.1} parent=1 // loop_footer
      %s16 = sadd.s32 1, %s12
    $region7: #{inception_module_old.1} parent=1 // loop_footer_branch
      %11 = sbr.rel target = $region3
    $region8: #{inception_module_old.1} parent=1 // loop_exit
      _
    %803 = vsyncpa [#allocation3], 1
    %s804 = scalar_lea.sflag [#allocation3], 1
    %805 = vsyncpa %s804, 1

</llo_original>
